<compile_context>
chip_gen: v5e
topology: v5e:2x2
jax: 0.10.0
libtpu: 0.0.40
codegen_flags: <defaults>
</compile_context>

<pallas_src>
import math

import jax
import jax.numpy as jnp
from jax.experimental import pallas as pl
from jax.experimental.pallas import tpu as pltpu


# Per-block byte budget — one configuration, safe across v5e / v6e / v7x.
_MAX_BLOCK_BYTES = 4 * 1024 * 1024      # cap on block_b * block_n * itemsize
_VMEM_LIMIT_BYTES = 48 * 1024 * 1024    # < 64 MiB physical VMEM per TC on v7x


def make_positional_encoding(d_model: int, seq_len: int) -> jnp.ndarray:
    """Deterministic sinusoidal PE table, shape (seq_len, d_model), float32."""
    position = jnp.arange(seq_len, dtype=jnp.float32)[:, None]            # (S, 1)
    deno_term = jnp.exp(
        jnp.arange(0, d_model, 2, dtype=jnp.float32)
        * -(math.log(10000.0) / d_model)
    )                                                                      # (D/2,)
    angles = position * deno_term                                          # (S, D/2)
    pe = jnp.zeros((seq_len, d_model), dtype=jnp.float32)
    pe = pe.at[:, 0::2].set(jnp.sin(angles))
    pe = pe.at[:, 1::2].set(jnp.cos(angles))
    return pe


def prepare_positional_encoding(pe_full: jnp.ndarray, t: int, dtype) -> jnp.ndarray:
    """Hoisted per-(T, dtype) preprocessing: slice, cast, lane-dense flatten.

    Returns pe of shape (1, t * d_model) in `dtype`. Do this once at setup time
    and reuse across forward calls.
    """
    d = pe_full.shape[-1]
    return pe_full[:t, :].astype(dtype).reshape(1, t * d)


def _round_down(x: int, m: int) -> int:
    return (x // m) * m


def _pick_blocks(B: int, N: int, elem: int) -> tuple[int, int]:
    """Choose (block_b, block_n) with block_b*block_n*elem <= _MAX_BLOCK_BYTES."""
    # dtype-aware sublane alignment: 8 rows (f32), 16 (bf16), 32 (int8/fp8).
    sub = max(8, 32 // elem)

    # Lane block first: multiple of 128 (or the full axis when tiny / already
    # aligned and under the cap). Cap sized so a `sub`-row-tall block fits the
    # byte budget (~512 KiB rows for f32).
    if N <= 128:
        block_n = N
    else:
        cap_n = max(128, _round_down(_MAX_BLOCK_BYTES // (sub * elem), 128))
        if N % 128 == 0 and N <= cap_n:
            block_n = N
        else:
            block_n = max(128, min(cap_n, _round_down(N, 128)))

    # Batch block second: multiple of `sub` (or the full batch when B < sub),
    # bounded so the block product stays under the byte budget. Ragged tails on
    # either axis are handled by the cdiv grid (Pallas masks edge blocks).
    if B <= sub:
        block_b = B
    else:
        max_b = max(sub, _round_down(_MAX_BLOCK_BYTES // (block_n * elem), sub))
        block_b = max(sub, min(max_b, _round_down(B, sub)))

    # v7x has 2 TensorCores: avoid a degenerate (1, 1) grid when splittable.
    if pl.cdiv(N, block_n) == 1 and pl.cdiv(B, block_b) == 1 and block_n >= 256:
        block_n = max(128, _round_down(block_n // 2, 128))

    return block_b, block_n


def _pe_add_kernel(x_ref, pe_ref, o_ref):
    # x_ref: (block_b, block_n); pe_ref: (1, block_n) broadcast over batch rows.
    o_ref[...] = (x_ref[...] + pe_ref[...]).astype(o_ref.dtype)


def positional_encoding_forward(x: jnp.ndarray, pe_flat: jnp.ndarray,
                                *, donate_x: bool = False) -> jnp.ndarray:
    """out = x + pe[:T] (eval-mode dropout == identity).

    x:       (B, T, d_model)
    pe_flat: (1, T*d_model), from prepare_positional_encoding (ideally x.dtype).
    """
    B, T, D = x.shape
    N = T * D
    elem = x.dtype.itemsize

    x2 = x.reshape(B, N)
    pe2 = pe_flat.astype(x.dtype).reshape(1, N)   # no-ops when prepared correctly

    block_b, block_n = _pick_blocks(B, N, elem)

    # Batch innermost -> pe block index unchanged across consecutive steps, so
    # Pallas keeps the pe tile resident (one pe DMA per lane block).
    grid = (pl.cdiv(N, block_n), pl.cdiv(B, block_b))

    out2 = pl.pallas_call(
        _pe_add_kernel,
        out_shape=jax.ShapeDtypeStruct((B, N), x.dtype),
        grid_spec=pltpu.PrefetchScalarGridSpec(
            num_scalar_prefetch=0,
            grid=grid,
            in_specs=[
                pl.BlockSpec((block_b, block_n), lambda n, b: (b, n)),
                pl.BlockSpec((1, block_n), lambda n, b: (0, n)),
            ],
            out_specs=pl.BlockSpec((block_b, block_n), lambda n, b: (b, n)),
        ),
        compiler_params=pltpu.CompilerParams(
            dimension_semantics=("parallel", "parallel"),
            vmem_limit_bytes=_VMEM_LIMIT_BYTES,
        ),
        input_output_aliases=({0: 0} if donate_x else {}),
    )(x2, pe2)

    return out2.reshape(B, T, D)


def positional_encoding_ref(x: jnp.ndarray, pe_full: jnp.ndarray) -> jnp.ndarray:
    return x + pe_full[None, : x.shape[1], :].astype(x.dtype)


if __name__ == "__main__":
    d_model = 32
    seq_len = 16   # max sequence length the PE buffer supports
    dropout = 0.1  # identity at inference
    B, T = 2, 8    # actual input uses T <= seq_len

    pe_full = make_positional_encoding(d_model, seq_len)

    # Case 1: small f32 (module demo shape); aligned lanes, degenerate-grid split.
    x = jax.random.normal(jax.random.PRNGKey(0), (B, T, d_model), dtype=jnp.float32)
    pe_flat = prepare_positional_encoding(pe_full, T, x.dtype)   # hoisted, reusable
    out = jax.block_until_ready(positional_encoding_forward(x, pe_flat))
    ref = positional_encoding_ref(x, pe_full)
    assert out.shape == x.shape and out.dtype == x.dtype
    assert jnp.allclose(out, ref, atol=1e-6, rtol=1e-6), "case 1 mismatch"

    # Case 2: ragged lane axis (T*D=140) and small odd batch — cdiv-masked edges.
    d2, t2, b2 = 20, 7, 5
    pe2_full = make_positional_encoding(d2, t2)
    x2 = jax.random.normal(jax.random.PRNGKey(1), (b2, t2, d2), dtype=jnp.float32)
    out2 = jax.block_until_ready(
        positional_encoding_forward(
            x2, prepare_positional_encoding(pe2_full, t2, x2.dtype)))
    assert jnp.allclose(out2, positional_encoding_ref(x2, pe2_full),
                        atol=1e-6, rtol=1e-6), "case 2 mismatch"

    # Case 3: bf16, ragged batch (20 % 16 != 0), donated input (aliasing path).
    b3 = 20
    x3 = jax.random.normal(jax.random.PRNGKey(2), (b3, T, d_model), dtype=jnp.bfloat16)
    pe3_flat = prepare_positional_encoding(pe_full, T, x3.dtype)
    ref3 = positional_encoding_ref(x3, pe_full)
    out3 = jax.block_until_ready(
        jax.jit(lambda xx, pp: positional_encoding_forward(xx, pp, donate_x=True),
                donate_argnums=(0,))(jnp.copy(x3), pe3_flat))
    assert out3.dtype == jnp.bfloat16 and out3.shape == x3.shape
    assert jnp.allclose(out3.astype(jnp.float32), ref3.astype(jnp.float32),
                        atol=2e-2, rtol=2e-2), "case 3 mismatch"

    print("KERNEL_OK")
</pallas_src>

<mosaic_0001>
module attributes {stable_mosaic.version = 11 : i64} {
  func.func @_pe_add_kernel(%arg0: i32, %arg1: i32, %arg2: memref<2x128xf32, #tpu.memory_space<vmem>>, %arg3: memref<1x128xf32, #tpu.memory_space<vmem>>, %arg4: memref<2x128xf32, #tpu.memory_space<vmem>>) attributes {dimension_semantics = [#tpu.dimension_semantics<parallel>, #tpu.dimension_semantics<parallel>], iteration_bounds = array<i64: 2, 1>, scalar_prefetch = 0 : i64, scratch_operands = 0 : i64, tpu.core_type = #tpu.core_type<tc>, window_params = [{transform_indices = @transform_0, window_bounds = array<i64: 2, 128>}, {transform_indices = @transform_1, window_bounds = array<i64: 1, 128>}, {transform_indices = @transform_2, window_bounds = array<i64: 2, 128>}]} {
    %c0 = arith.constant 0 : index
    %c0_0 = arith.constant 0 : index
    %0 = vector.load %arg2[%c0, %c0_0] : memref<2x128xf32, #tpu.memory_space<vmem>>, vector<2x128xf32>
    %c0_1 = arith.constant 0 : index
    %c0_2 = arith.constant 0 : index
    %1 = vector.load %arg3[%c0_1, %c0_2] : memref<1x128xf32, #tpu.memory_space<vmem>>, vector<1x128xf32>
    %2 = vector.broadcast %1 : vector<1x128xf32> to vector<2x128xf32>
    %3 = arith.addf %0, %2 : vector<2x128xf32>
    %c0_3 = arith.constant 0 : index
    %c0_4 = arith.constant 0 : index
    %4 = vector.load %arg4[%c0_3, %c0_4] : memref<2x128xf32, #tpu.memory_space<vmem>>, vector<2x128xf32>
    tpu.vector_store %arg4[%c0_3, %c0_4], %3 {strides = array<i32>} : memref<2x128xf32, #tpu.memory_space<vmem>>, vector<2x128xf32>,
    return
  }
  func.func @transform_0(%arg0: i32, %arg1: i32) -> (i32, i32) {
    %c0_i32 = arith.constant 0 : i32
    return %arg1, %arg0 : i32, i32
  }
  func.func @transform_1(%arg0: i32, %arg1: i32) -> (i32, i32) {
    %c0_i32 = arith.constant 0 : i32
    %c0_i32_0 = arith.constant 0 : i32
    return %c0_i32, %arg0 : i32, i32
  }
  func.func @transform_2(%arg0: i32, %arg1: i32) -> (i32, i32) {
    %c0_i32 = arith.constant 0 : i32
    return %arg1, %arg0 : i32, i32
  }
}

</mosaic_0001>

<llo_original>
// kernel: tpu_custom_call.1
$region0: #{tpu_custom_call.1}
  #allocation0 [shape = 'u32[]', space=smem, size = 0x4, offset = 0x4, fixed_abs, tag = 'smem constant byte address 0x4 - core index']
  #allocation1 [shape = 'u32[72,128]{1,0:T(1,128)}', space=vmem, size = 0x9000, scoped, tag = 'internal scratch']
  %s0 = inlined_call_operand.hbm [shape: f32[2,256], index: 0, kind: input, shape index: {}]
  %s1 = inlined_call_operand.hbm [shape: f32[1,256], index: 1, kind: input, shape index: {}]
  %s2 = inlined_call_operand.hbm [shape: f32[2,256], index: 2, kind: output, shape index: {}]
  %s3 = sld [smem:[#allocation0]]
  $region49: #{tpu_custom_call.1} parent=0
    _
  %s5 = ssub.s32 1, %s3
  %s6 = scalar_select 0, %s5, %s3
  $region1: #{tpu_custom_call.1} parent=0
    #allocation2 [shape = 'u8[2048]{0}', space=vmem, size = 0x800, scoped, tag = 'input window, operand 0']
    #allocation3 [shape = 's32[2]{0}', space=sflag, size = 0x8, scoped, tag = 'scoped memory for tpu_custom_call.1']
    #allocation4 [shape = 's32[2]{0}', space=sflag, size = 0x8, scoped, tag = 'scoped memory for tpu_custom_call.1']
    #allocation5 [shape = 'u8[1024]{0}', space=vmem, size = 0x400, scoped, tag = 'input window, operand 1']
    #allocation6 [shape = 's32[2]{0}', space=sflag, size = 0x8, scoped, tag = 'scoped memory for tpu_custom_call.1']
    #allocation7 [shape = 'u8[2048]{0}', space=vmem, size = 0x800, scoped, tag = 'output window, operand 0']
    %7 = vsyncpa [#allocation3], 0
    %s8 = scalar_lea.sflag [#allocation3], 1
    %9 = vsyncpa %s8, 0
    %10 = vsyncpa [#allocation6], 0
    %s11 = scalar_lea.sflag [#allocation6], 1
    %12 = vsyncpa %s11, 0
    %13 = vsyncpa [#allocation4], 0
    %s14 = scalar_lea.sflag [#allocation4], 1
    %15 = vsyncpa %s14, 0
    loop: start=0, step=1, limit=4
    $region2: #{tpu_custom_call.1} parent=1 // loop_pre_header
      _
    $region3: #{tpu_custom_call.1} parent=1 // loop_header
      %s17 = sphi 0, %s21
      %p18 = scmp.ge.s32.totalorder %s17, 4
      %s24 = sphi 0, %s36
      %s25 = sphi 0, %s32
      %s26 = sphi 0, %s24
      %s27 = sphi 0, %s25
      %s28 = sphi 0, %s26
      %s29 = sphi 0, %s27
      %s41 = sphi 0, %s43
      %s44 = sphi 0, %s41
      %s45 = sphi 0, %s44
      %s61 = sphi 0, %s45
      %s67 = sphi 0, %s69
      %s70 = sphi 0, %s67
      %s71 = sphi 0, %s70
      %s87 = sphi 0, %s71
      %s95 = sphi 0, %s97
      %s98 = sphi 0, %s95
      %s99 = sphi 0, %s98
      %s115 = sphi 0, %s99
    $region4: #{tpu_custom_call.1} parent=1 // loop_header_branch
      %20 = sbr.rel (%p18) target = $region8
    $region5: #{tpu_custom_call.1} parent=1 // loop_body
      %s22 = ssub.s32 %s17, 1
      %s23 = ssub.s32 %s17, 2
      %s30 = sadd.s32 1, %s25
      %p31 = scmp.ge.s32.totalorder %s30, 1
      %s32 = scalar_select %p31, 0, %s30
      %s33 = sadd.s32 1, %s24
      %s34 = scalar_select %p31, %s33, %s24
      %p35 = scmp.ge.s32.totalorder %s34, 2
      %s36 = scalar_select %p35, 0, %s34
      %s37 = ssub.s32 %s25, %s32
      %s38 = ssub.s32 %s24, %s36
      %s39 = sor.u32 %s37, %s38
      %p40 = scmp.eq.s32.totalorder %s39, 0
      %s42 = sadd.s32 %s41, 1
      %s43 = scalar_select %p40, %s41, %s42
      %p46 = pneg %p40
      %p47 = scmp.eq.s32.totalorder %s17, 1
      %p48 = por %p46, %p47
      %p49 = scmp.ne.s32.totalorder %s41, %s44
      %p50 = scmp.eq.s32.totalorder %s17, 0
      %p51 = por %p49, %p50
      %p52 = scmp.ne.s32.totalorder %s41, %s44
      %p53 = scmp.eq.s32.totalorder %s22, 1
      %p54 = por %p52, %p53
      %p55 = scmp.ne.s32.totalorder %s44, %s45
      %p56 = scmp.eq.s32.totalorder %s22, 0
      %p57 = por %p55, %p56
      %p58 = scmp.ne.s32.totalorder %s44, %s45
      %p59 = scmp.eq.s32.totalorder %s23, 1
      %p60 = por %p58, %p59
      %p62 = scmp.ne.s32.totalorder %s45, %s61
      %p63 = scmp.eq.s32.totalorder %s23, 0
      %p64 = por %p62, %p63
      %s65 = ssub.s32 %s24, %s36
      %p66 = scmp.eq.s32.totalorder %s65, 0
      %s68 = sadd.s32 %s67, 1
      %s69 = scalar_select %p66, %s67, %s68
      %p72 = pneg %p66
      %p73 = scmp.eq.s32.totalorder %s17, 1
      %p74 = por %p72, %p73
      %p75 = scmp.ne.s32.totalorder %s67, %s70
      %p76 = scmp.eq.s32.totalorder %s17, 0
      %p77 = por %p75, %p76
      %p78 = scmp.ne.s32.totalorder %s67, %s70
      %p79 = scmp.eq.s32.totalorder %s22, 1
      %p80 = por %p78, %p79
      %p81 = scmp.ne.s32.totalorder %s70, %s71
      %p82 = scmp.eq.s32.totalorder %s22, 0
      %p83 = por %p81, %p82
      %p84 = scmp.ne.s32.totalorder %s70, %s71
      %p85 = scmp.eq.s32.totalorder %s23, 1
      %p86 = por %p84, %p85
      %p88 = scmp.ne.s32.totalorder %s71, %s87
      %p89 = scmp.eq.s32.totalorder %s23, 0
      %p90 = por %p88, %p89
      %s91 = ssub.s32 %s25, %s32
      %s92 = ssub.s32 %s24, %s36
      %s93 = sor.u32 %s91, %s92
      %p94 = scmp.eq.s32.totalorder %s93, 0
      %s96 = sadd.s32 %s95, 1
      %s97 = scalar_select %p94, %s95, %s96
      %p100 = pneg %p94
      %p101 = scmp.eq.s32.totalorder %s17, 1
      %p102 = por %p100, %p101
      %p103 = scmp.ne.s32.totalorder %s95, %s98
      %p104 = scmp.eq.s32.totalorder %s17, 0
      %p105 = por %p103, %p104
      %p106 = scmp.ne.s32.totalorder %s95, %s98
      %p107 = scmp.eq.s32.totalorder %s22, 1
      %p108 = por %p106, %p107
      %p109 = scmp.ne.s32.totalorder %s98, %s99
      %p110 = scmp.eq.s32.totalorder %s22, 0
      %p111 = por %p109, %p110
      %p112 = scmp.ne.s32.totalorder %s98, %s99
      %p113 = scmp.eq.s32.totalorder %s23, 1
      %p114 = por %p112, %p113
      %p116 = scmp.ne.s32.totalorder %s99, %s115
      %p117 = scmp.eq.s32.totalorder %s23, 0
      %p118 = por %p116, %p117
      %p119 = scmp.le.s32.totalorder 1, %s17
      %p120 = scmp.lt.s32.totalorder %s17, 3
      %p121 = pnand %p119, %p120
      %p122 = pneg %p121
      // Predicated region
      $region9: #{tpu_custom_call.1} parent=5 // pred_check
        _
      $region10: #{tpu_custom_call.1} parent=5 // pred_check_branch
        %124 = sbr.rel (%p121) target = $region12
      $region11: #{tpu_custom_call.1} parent=5 // pred_region
        %s125 = ssub.s32 %s17, 1
      $region12: #{tpu_custom_call.1} parent=5 // pred_fallthru
        _
      %p126 = scmp.lt.s32.totalorder %s17, 2
      // Predicated region
      $region13: #{tpu_custom_call.1} parent=5 // pred_check
        %p127 = pneg %p126
      $region14: #{tpu_custom_call.1} parent=5 // pred_check_branch
        %129 = sbr.rel (%p127) target = $region16
      $region15: #{tpu_custom_call.1} parent=5 // pred_region
        // Predicated region
        $region17: #{tpu_custom_call.1} parent=15 // pred_check
          %p130 = pneg %p51
        $region18: #{tpu_custom_call.1} parent=15 // pred_check_branch
          %132 = sbr.rel (%p130) target = $region20
        $region19: #{tpu_custom_call.1} parent=15 // pred_region
          %s133 = sand.u32 %s41, 1
          %s134 = scalar_lea.sflag [#allocation3], %s133
          %s135 = sand.u32 %s41, 1
          %s136 = smul.addr %s135, 2
          %s137 = scalar_lea.vmem [#allocation2], %s136
          %139 = vsyncadd %s134, 0
          %s140 = smul.addr %s25, 2
          %s141 = sadd.s32 %s24, %s140
          %s142 = smul.addr %s141, 2
          %s143 = scalar_lea.hbm %s0, %s142
          %s145 = sshll.u32 %s143, 4
          %s146 = int_to_ptr.hbm [resolvable:$true] %s145
          %s147 = sshll.u32 %s137, 4
          %s148 = int_to_ptr.vmem [resolvable:$true] %s147
          %150 = dma.hbm_to_vmem [thread:$0]  %s146, 32, %s148, %s134
        $region20: #{tpu_custom_call.1} parent=15 // pred_fallthru
          _
        // Predicated region
        $region21: #{tpu_custom_call.1} parent=15 // pred_check
          %p151 = pneg %p77
        $region22: #{tpu_custom_call.1} parent=15 // pred_check_branch
          %153 = sbr.rel (%p151) target = $region24
        $region23: #{tpu_custom_call.1} parent=15 // pred_region
          %s154 = sand.u32 %s67, 1
          %s155 = scalar_lea.sflag [#allocation6], %s154
          %s156 = sand.u32 %s67, 1
          %s157 = scalar_lea.vmem [#allocation5], %s156
          %159 = vsyncadd %s155, 0
          %s160 = scalar_lea.hbm %s1, %s24
          %s162 = sshll.u32 %s160, 4
          %s163 = int_to_ptr.hbm [resolvable:$true] %s162
          %s164 = sshll.u32 %s157, 4
          %s165 = int_to_ptr.vmem [resolvable:$true] %s164
          %167 = dma.hbm_to_vmem [thread:$0]  %s163, 16, %s165, %s155
        $region24: #{tpu_custom_call.1} parent=15 // pred_fallthru
          _
      $region16: #{tpu_custom_call.1} parent=5 // pred_fallthru
        _
      %p168 = scmp.le.s32.totalorder 1, %s17
      %p169 = scmp.lt.s32.totalorder %s17, 3
      %p170 = pnand %p168, %p169
      %p171 = pneg %p170
      // Predicated region
      $region25: #{tpu_custom_call.1} parent=5 // pred_check
        _
      $region26: #{tpu_custom_call.1} parent=5 // pred_check_branch
        %173 = sbr.rel (%p170) target = $region28
      $region27: #{tpu_custom_call.1} parent=5 // pred_region
        %s174 = ssub.s32 %s17, 1
        %s175 = sand.u32 %s44, 1
        %s176 = scalar_lea.sflag [#allocation3], %s175
        %s177 = sand.u32 %s44, 1
        %s178 = smul.addr %s177, 2
        %s179 = scalar_lea.vmem [#allocation2], %s178
        // Predicated region
        $region29: #{tpu_custom_call.1} parent=27 // pred_check
          %p180 = pneg %p57
        $region30: #{tpu_custom_call.1} parent=27 // pred_check_branch
          %182 = sbr.rel (%p180) target = $region32
        $region31: #{tpu_custom_call.1} parent=27 // pred_region
          %184 = dma.done %s176, 32
        $region32: #{tpu_custom_call.1} parent=27 // pred_fallthru
          _
        %s185 = sand.u32 %s70, 1
        %s186 = scalar_lea.sflag [#allocation6], %s185
        %s187 = sand.u32 %s70, 1
        %s188 = scalar_lea.vmem [#allocation5], %s187
        // Predicated region
        $region33: #{tpu_custom_call.1} parent=27 // pred_check
          %p189 = pneg %p83
        $region34: #{tpu_custom_call.1} parent=27 // pred_check_branch
          %191 = sbr.rel (%p189) target = $region36
        $region35: #{tpu_custom_call.1} parent=27 // pred_region
          %193 = dma.done %s186, 16
        $region36: #{tpu_custom_call.1} parent=27 // pred_fallthru
          _
        %s194 = sand.u32 %s44, 1
        %s195 = scalar_lea.sflag [#allocation3], %s194
        %s196 = sand.u32 %s44, 1
        %s197 = smul.addr %s196, 2
        %s198 = scalar_lea.vmem [#allocation2], %s197
        %p199 = pneg %p57
        %p200 = pneg %p54
        %s201 = sand.u32 %s70, 1
        %s202 = scalar_lea.sflag [#allocation6], %s201
        %s203 = sand.u32 %s70, 1
        %s204 = scalar_lea.vmem [#allocation5], %s203
        %p205 = pneg %p83
        %p206 = pneg %p80
        %p207 = pneg %p111
        %p208 = pneg %p108
        %s209 = sand.u32 %s98, 1
        %s210 = scalar_lea.sflag [#allocation4], %s209
        %s211 = sand.u32 %s98, 1
        %s212 = smul.addr %s211, 2
        %s213 = scalar_lea.vmem [#allocation7], %s212
        %v214 = vld [vmem:[%s179] sm:$0x3]
        %v215 = vld [vmem:[%s188] sm:$0x1]
        %v217 = vperm.slane %v215, 0
        %v219 = vadd.f32 %v214, %v217
        %220 = vst [vmem:[%s213] sm:$0x3] %v219
        %s221 = sand.u32 %s98, 1
        %s222 = scalar_lea.sflag [#allocation4], %s221
        %s223 = sand.u32 %s98, 1
        %s224 = smul.addr %s223, 2
        %s225 = scalar_lea.vmem [#allocation7], %s224
        // Predicated region
        $region37: #{tpu_custom_call.1} parent=27 // pred_check
          %p226 = pneg %p108
        $region38: #{tpu_custom_call.1} parent=27 // pred_check_branch
          %228 = sbr.rel (%p226) target = $region40
        $region39: #{tpu_custom_call.1} parent=27 // pred_region
          %230 = vsyncadd %s222, 0
          %s231 = smul.addr %s27, 2
          %s232 = sadd.s32 %s26, %s231
          %s233 = smul.addr %s232, 2
          %s234 = scalar_lea.hbm %s2, %s233
          %s236 = sshll.u32 %s225, 4
          %s237 = int_to_ptr.vmem [resolvable:$true] %s236
          %s238 = sshll.u32 %s234, 4
          %s239 = int_to_ptr.hbm [resolvable:$true] %s238
          %241 = dma.vmem_to_hbm [thread:$0]  %s237, 32, %s239, %s222
        $region40: #{tpu_custom_call.1} parent=27 // pred_fallthru
          _
      $region28: #{tpu_custom_call.1} parent=5 // pred_fallthru
        _
      %p242 = scmp.le.s32.totalorder 2, %s17
      // Predicated region
      $region41: #{tpu_custom_call.1} parent=5 // pred_check
        %p243 = pneg %p242
      $region42: #{tpu_custom_call.1} parent=5 // pred_check_branch
        %245 = sbr.rel (%p243) target = $region44
      $region43: #{tpu_custom_call.1} parent=5 // pred_region
        %s246 = ssub.s32 %s17, 2
        // Predicated region
        $region45: #{tpu_custom_call.1} parent=43 // pred_check
          %p247 = pneg %p114
        $region46: #{tpu_custom_call.1} parent=43 // pred_check_branch
          %249 = sbr.rel (%p247) target = $region48
        $region47: #{tpu_custom_call.1} parent=43 // pred_region
          %s250 = sand.u32 %s99, 1
          %s251 = scalar_lea.sflag [#allocation4], %s250
          %s252 = sand.u32 %s99, 1
          %s253 = smul.addr %s252, 2
          %s254 = scalar_lea.vmem [#allocation7], %s253
          %256 = dma.done %s251, 32
        $region48: #{tpu_custom_call.1} parent=43 // pred_fallthru
          _
      $region44: #{tpu_custom_call.1} parent=5 // pred_fallthru
        _
    $region6: #{tpu_custom_call.1} parent=1 // loop_footer
      %s21 = sadd.s32 1, %s17
    $region7: #{tpu_custom_call.1} parent=1 // loop_footer_branch
      %16 = sbr.rel target = $region3
    $region8: #{tpu_custom_call.1} parent=1 // loop_exit
      _
    %257 = vsyncpa [#allocation3], 1
    %s258 = scalar_lea.sflag [#allocation3], 1
    %259 = vsyncpa %s258, 1
    %260 = vsyncpa [#allocation6], 1
    %s261 = scalar_lea.sflag [#allocation6], 1
    %262 = vsyncpa %s261, 1
    %263 = vsyncpa [#allocation4], 1
    %s264 = scalar_lea.sflag [#allocation4], 1
    %265 = vsyncpa %s264, 1

</llo_original>
